<compile_context>
chip_gen: v7x
topology: tpu7x:2x2x1
jax: 0.10.0
libtpu: 0.0.40
codegen_flags: <defaults>
</compile_context>

<pallas_src>
import functools

import jax
import jax.numpy as jnp
from jax.experimental import pallas as pl
from jax.experimental.pallas import tpu as pltpu


def _full_spec(shape):
    nd = len(shape)
    return pl.BlockSpec(shape, lambda i: (0,) * nd)


def _round_up(x, m):
    return -(-x // m) * m


# ------------------------- fused forward kernel body --------------------------
def _make_fused_kernel(num_layers, num_dir, hidden_size):
    H = hidden_size

    def kernel(xflat_ref, convw_ref, convb_ref, *refs):
        # refs = [wih_t, bias  per (layer, dir) ..., fc_wt, fc_b, out]
        *w_refs, out_ref = refs
        lstm_refs = w_refs[:-2]
        fc_wt_ref, fc_b_ref = w_refs[-2], w_refs[-1]

        # ---- Conv1d(10->1, k=5, pad=2) + ReLU as one MXU matmul -------------
        # xflat: (Bp, Cin*Lpad); convw: (Cin*Lpad, L) banded Toeplitz weights.
        conv = jnp.dot(xflat_ref[...], convw_ref[...],
                       preferred_element_type=jnp.float32)
        feat = jnp.maximum(conv + convb_ref[0, 0], 0.0)          # (Bp, L)

        # ---- LSTM stack, specialized for seq_len == 1 and zero (h0, c0) -----
        #   h0 @ W_hh == 0 and f * c0 == 0  =>  gates = x @ W_ih^T + b,
        #   c = i * g, h = o * tanh(c).
        inp = feat
        idx = 0
        for _layer in range(num_layers):
            outs = []
            for _d in range(num_dir):
                wih_t = lstm_refs[idx][...]         # (Din, 4H)
                bias = lstm_refs[idx + 1][...]      # (1, 4H)
                idx += 2
                gates = jnp.dot(inp, wih_t,
                                preferred_element_type=jnp.float32) + bias
                i_g = jax.nn.sigmoid(gates[:, 0:H])
                g_g = jnp.tanh(gates[:, 2 * H:3 * H])
                o_g = jax.nn.sigmoid(gates[:, 3 * H:4 * H])
                outs.append(o_g * jnp.tanh(i_g * g_g))
            inp = jnp.concatenate(outs, axis=-1) if num_dir == 2 else outs[0]

        # ---- Linear(fc_in -> 500), lane-padded to 512 for a dense store -----
        out_ref[...] = (jnp.dot(inp, fc_wt_ref[...],
                                preferred_element_type=jnp.float32)
                        + fc_b_ref[...])

    return kernel


# ------------------------------- full forward ---------------------------------
def conv_lstm1d_forward(params, x, hidden_size, num_layers, bidirectional):
    B, Cin, L = x.shape
    num_dir = 2 if bidirectional else 1
    H = hidden_size

    conv_w = params["conv_w"]            # (1, Cin, K)
    conv_b = params["conv_b"]            # (1,)
    K = conv_w.shape[-1]
    pad = (K - 1) // 2
    Lp = L + 2 * pad

    # Pad batch to a full sublane tile (multiple of 8); crop at the end.
    B_pad = _round_up(max(B, 8), 8)
    if B_pad != B:
        x = jnp.pad(x, ((0, B_pad - B), (0, 0), (0, 0)))

    # Activations: zero-pad spatially, flatten (Cin, Lp) onto the lane axis.
    xpad = jnp.pad(x, ((0, 0), (0, 0), (pad, pad)))
    xflat = xpad.reshape(B_pad, Cin * Lp).astype(jnp.float32)

    # Conv weights as a banded (Toeplitz) matrix so the conv is a single dot:
    #   W_conv[c*Lp + t, l] = w[0, c, t - l] if 0 <= t - l < K else 0
    #   => (xflat @ W_conv)[b, l] = sum_{c,k} xpad[b, c, l+k] * w[0, c, k]
    w2 = conv_w.reshape(Cin, K).astype(jnp.float32)
    k_idx = jnp.arange(Lp)[:, None] - jnp.arange(L)[None, :]          # (Lp, L)
    valid = (k_idx >= 0) & (k_idx < K)
    band = jnp.where(valid[None, :, :],
                     w2[:, jnp.clip(k_idx, 0, K - 1)], 0.0)           # (Cin, Lp, L)
    w_conv = band.reshape(Cin * Lp, L)
    cb = conv_b.reshape(1, 1).astype(jnp.float32)

    operands = [xflat, w_conv, cb]
    in_specs = [_full_spec(xflat.shape), _full_spec(w_conv.shape),
                pl.BlockSpec(memory_space=pltpu.MemorySpace.SMEM)]

    # LSTM weights: only W_ih^T and the combined bias are needed (zero h0/c0).
    for layer in range(num_layers):
        for d in range(num_dir):
            p = params["lstm"][(layer, d)]
            wih_t = p["w_ih"].T.astype(jnp.float32)                   # (Din, 4H)
            bias = (p["b_ih"] + p["b_hh"]).reshape(1, 4 * H).astype(jnp.float32)
            operands += [wih_t, bias]
            in_specs += [_full_spec(wih_t.shape), _full_spec(bias.shape)]

    # FC weights, lane-padded to a multiple of 128 output columns.
    fc_w, fc_b = params["fc_w"], params["fc_b"]
    out_f = fc_w.shape[0]
    out_pad = _round_up(out_f, 128)
    fc_wt = jnp.pad(fc_w.T.astype(jnp.float32), ((0, 0), (0, out_pad - out_f)))
    fc_bp = jnp.pad(fc_b.astype(jnp.float32), (0, out_pad - out_f)).reshape(1, out_pad)
    operands += [fc_wt, fc_bp]
    in_specs += [_full_spec(fc_wt.shape), _full_spec(fc_bp.shape)]

    kernel = _make_fused_kernel(num_layers, num_dir, H)
    out = pl.pallas_call(
        kernel,
        grid=(1,),
        out_shape=jax.ShapeDtypeStruct((B_pad, out_pad), jnp.float32),
        in_specs=in_specs,
        out_specs=_full_spec((B_pad, out_pad)),
        compiler_params=pltpu.CompilerParams(
            dimension_semantics=("arbitrary",)),
    )(*operands)
    return out[:B, :out_f]


# --------------------------- pure-JAX reference --------------------------------
def _ref_forward(params, x, hidden_size, num_layers, bidirectional):
    B, Cin, L = x.shape
    w, b = params["conv_w"], params["conv_b"]
    K = w.shape[-1]
    pad = (K - 1) // 2
    xpad = jnp.pad(x, ((0, 0), (0, 0), (pad, pad)))
    conv = jnp.zeros((B, L), jnp.float32)
    for k in range(K):
        conv = conv + jnp.einsum("bcl,c->bl", xpad[:, :, k:k + L], w[0, :, k])
    inp = jnp.maximum(conv + b[0], 0.0)
    num_dir = 2 if bidirectional else 1
    for layer in range(num_layers):
        outs = []
        for d in range(num_dir):
            p = params["lstm"][(layer, d)]
            gates = inp @ p["w_ih"].T + p["b_ih"] + p["b_hh"]
            H = hidden_size
            i = jax.nn.sigmoid(gates[:, 0:H])
            f = jax.nn.sigmoid(gates[:, H:2 * H])
            g = jnp.tanh(gates[:, 2 * H:3 * H])
            o = jax.nn.sigmoid(gates[:, 3 * H:4 * H])
            c = i * g                       # c0 == 0 -> f * c0 vanishes
            outs.append(o * jnp.tanh(c))
        inp = jnp.concatenate(outs, axis=-1) if num_dir == 2 else outs[0]
    return inp @ params["fc_w"].T + params["fc_b"]


# ----------------------------- parameter init ----------------------------------
def init_params(key, input_size, hidden_size, num_layers, bidirectional):
    num_dir = 2 if bidirectional else 1
    fc_in = num_dir * hidden_size
    ks = iter(jax.random.split(key, 6 + 4 * num_layers * num_dir))

    def u(k, shape, scale):
        return jax.random.uniform(k, shape, jnp.float32, -scale, scale)

    params = {
        "conv_w": u(next(ks), (1, 10, 5), 1.0 / (10 * 5) ** 0.5),
        "conv_b": u(next(ks), (1,), 1.0 / (10 * 5) ** 0.5),
        "fc_w": u(next(ks), (500, fc_in), 1.0 / fc_in ** 0.5),
        "fc_b": u(next(ks), (500,), 1.0 / fc_in ** 0.5),
        "lstm": {},
    }
    s = 1.0 / hidden_size ** 0.5
    for layer in range(num_layers):
        d_in = input_size if layer == 0 else num_dir * hidden_size
        for d in range(num_dir):
            params["lstm"][(layer, d)] = {
                "w_ih": u(next(ks), (4 * hidden_size, d_in), s),
                "w_hh": u(next(ks), (4 * hidden_size, hidden_size), s),
                "b_ih": u(next(ks), (4 * hidden_size,), s),
                "b_hh": u(next(ks), (4 * hidden_size,), s),
            }
    return params


if __name__ == "__main__":
    # Module config: input_size == L (conv output width feeds the LSTM);
    # kernel_size is stored by the module but unused in its forward.
    batch, in_channels, L = 2, 10, 16
    input_size, hidden_size, num_layers, bidirectional = L, 32, 2, False

    key = jax.random.PRNGKey(0)
    pkey, xkey = jax.random.split(key)
    params = init_params(pkey, input_size, hidden_size, num_layers, bidirectional)
    x = jax.random.normal(xkey, (batch, in_channels, L), jnp.float32)

    fwd = functools.partial(conv_lstm1d_forward, hidden_size=hidden_size,
                            num_layers=num_layers, bidirectional=bidirectional)
    out = jax.jit(fwd)(params, x)
    out = jax.block_until_ready(out)
    assert out.shape == (batch, 500), out.shape

    ref = _ref_forward(params, x, hidden_size, num_layers, bidirectional)
    assert jnp.allclose(out, ref, atol=2e-2, rtol=2e-2), float(jnp.max(jnp.abs(out - ref)))

    print("KERNEL_OK")
</pallas_src>

<mosaic_0001>
module attributes {stable_mosaic.version = 11 : i64} {
  func.func @kernel(%arg0: i32, %arg1: memref<8x200xf32, #tpu.memory_space<vmem>>, %arg2: memref<200x16xf32, #tpu.memory_space<vmem>>, %arg3: memref<1x1xf32, #tpu.memory_space<smem>>, %arg4: memref<16x128xf32, #tpu.memory_space<vmem>>, %arg5: memref<1x128xf32, #tpu.memory_space<vmem>>, %arg6: memref<32x128xf32, #tpu.memory_space<vmem>>, %arg7: memref<1x128xf32, #tpu.memory_space<vmem>>, %arg8: memref<32x512xf32, #tpu.memory_space<vmem>>, %arg9: memref<1x512xf32, #tpu.memory_space<vmem>>, %arg10: memref<8x512xf32, #tpu.memory_space<vmem>>) attributes {dimension_semantics = [#tpu.dimension_semantics<arbitrary>], iteration_bounds = array<i64: 1>, scalar_prefetch = 0 : i64, scratch_operands = 0 : i64, tpu.core_type = #tpu.core_type<tc>, window_params = [{pipeline_mode = #tpu.pipeline_mode<synchronous>, transform_indices = @transform_0, window_bounds = array<i64: 8, 200>}, {pipeline_mode = #tpu.pipeline_mode<synchronous>, transform_indices = @transform_1, window_bounds = array<i64: 200, 16>}, {transform_indices = @transform_2, window_bounds = array<i64: 1, 1>}, {pipeline_mode = #tpu.pipeline_mode<synchronous>, transform_indices = @transform_3, window_bounds = array<i64: 16, 128>}, {pipeline_mode = #tpu.pipeline_mode<synchronous>, transform_indices = @transform_4, window_bounds = array<i64: 1, 128>}, {pipeline_mode = #tpu.pipeline_mode<synchronous>, transform_indices = @transform_5, window_bounds = array<i64: 32, 128>}, {pipeline_mode = #tpu.pipeline_mode<synchronous>, transform_indices = @transform_6, window_bounds = array<i64: 1, 128>}, {pipeline_mode = #tpu.pipeline_mode<synchronous>, transform_indices = @transform_7, window_bounds = array<i64: 32, 512>}, {pipeline_mode = #tpu.pipeline_mode<synchronous>, transform_indices = @transform_8, window_bounds = array<i64: 1, 512>}, {pipeline_mode = #tpu.pipeline_mode<synchronous>, transform_indices = @transform_9, window_bounds = array<i64: 8, 512>}]} {
    %c0 = arith.constant 0 : index
    %c0_0 = arith.constant 0 : index
    %0 = vector.load %arg1[%c0, %c0_0] : memref<8x200xf32, #tpu.memory_space<vmem>>, vector<8x200xf32>
    %c0_1 = arith.constant 0 : index
    %c0_2 = arith.constant 0 : index
    %1 = vector.load %arg2[%c0_1, %c0_2] : memref<200x16xf32, #tpu.memory_space<vmem>>, vector<200x16xf32>
    %cst = arith.constant dense<0.000000e+00> : vector<8x16xf32>
    %2 = tpu.matmul %0, %1, %cst {dimension_numbers = #tpu.dot_dimension_numbers<[1], [0], [0], [1], [0, 0, 1, 1], [], []>} : vector<8x200xf32>, vector<200x16xf32>, vector<8x16xf32> -> vector<8x16xf32>
    %c0_3 = arith.constant 0 : index
    %c0_4 = arith.constant 0 : index
    %3 = memref.load %arg3[%c0_3, %c0_4] : memref<1x1xf32, #tpu.memory_space<smem>>
    %4 = vector.broadcast %3 : f32 to vector<8x16xf32>
    %5 = arith.addf %2, %4 : vector<8x16xf32>
    %cst_5 = arith.constant 0.000000e+00 : f32
    %6 = vector.broadcast %cst_5 : f32 to vector<8x16xf32>
    %7 = arith.maximumf %5, %6 : vector<8x16xf32>
    %c0_6 = arith.constant 0 : index
    %c0_7 = arith.constant 0 : index
    %8 = vector.load %arg4[%c0_6, %c0_7] : memref<16x128xf32, #tpu.memory_space<vmem>>, vector<16x128xf32>
    %c0_8 = arith.constant 0 : index
    %c0_9 = arith.constant 0 : index
    %9 = vector.load %arg5[%c0_8, %c0_9] : memref<1x128xf32, #tpu.memory_space<vmem>>, vector<1x128xf32>
    %cst_10 = arith.constant dense<0.000000e+00> : vector<8x128xf32>
    %10 = tpu.matmul %7, %8, %cst_10 {dimension_numbers = #tpu.dot_dimension_numbers<[1], [0], [0], [1], [0, 0, 1, 1], [], []>} : vector<8x16xf32>, vector<16x128xf32>, vector<8x128xf32> -> vector<8x128xf32>
    %11 = vector.broadcast %9 : vector<1x128xf32> to vector<8x128xf32>
    %12 = arith.addf %10, %11 : vector<8x128xf32>
    %13 = vector.extract_strided_slice %12 {offsets = [0, 0], sizes = [8, 32], strides = [1, 1]} : vector<8x128xf32> to vector<8x32xf32>
    %14 = arith.negf %13 : vector<8x32xf32>
    %15 = math.exp %14 : vector<8x32xf32>
    %cst_11 = arith.constant 1.000000e+00 : f32
    %16 = vector.broadcast %cst_11 : f32 to vector<8x32xf32>
    %17 = arith.addf %16, %15 : vector<8x32xf32>
    %18 = arith.divf %16, %17 : vector<8x32xf32>
    %19 = vector.extract_strided_slice %12 {offsets = [0, 64], sizes = [8, 32], strides = [1, 1]} : vector<8x128xf32> to vector<8x32xf32>
    %20 = math.tanh %19 : vector<8x32xf32>
    %21 = vector.extract_strided_slice %12 {offsets = [0, 96], sizes = [8, 32], strides = [1, 1]} : vector<8x128xf32> to vector<8x32xf32>
    %22 = arith.negf %21 : vector<8x32xf32>
    %23 = math.exp %22 : vector<8x32xf32>
    %cst_12 = arith.constant 1.000000e+00 : f32
    %24 = vector.broadcast %cst_12 : f32 to vector<8x32xf32>
    %25 = arith.addf %24, %23 : vector<8x32xf32>
    %26 = arith.divf %24, %25 : vector<8x32xf32>
    %27 = arith.mulf %18, %20 : vector<8x32xf32>
    %28 = math.tanh %27 : vector<8x32xf32>
    %29 = arith.mulf %26, %28 : vector<8x32xf32>
    %c0_13 = arith.constant 0 : index
    %c0_14 = arith.constant 0 : index
    %30 = vector.load %arg6[%c0_13, %c0_14] : memref<32x128xf32, #tpu.memory_space<vmem>>, vector<32x128xf32>
    %c0_15 = arith.constant 0 : index
    %c0_16 = arith.constant 0 : index
    %31 = vector.load %arg7[%c0_15, %c0_16] : memref<1x128xf32, #tpu.memory_space<vmem>>, vector<1x128xf32>
    %cst_17 = arith.constant dense<0.000000e+00> : vector<8x128xf32>
    %32 = tpu.matmul %29, %30, %cst_17 {dimension_numbers = #tpu.dot_dimension_numbers<[1], [0], [0], [1], [0, 0, 1, 1], [], []>} : vector<8x32xf32>, vector<32x128xf32>, vector<8x128xf32> -> vector<8x128xf32>
    %33 = vector.broadcast %31 : vector<1x128xf32> to vector<8x128xf32>
    %34 = arith.addf %32, %33 : vector<8x128xf32>
    %35 = vector.extract_strided_slice %34 {offsets = [0, 0], sizes = [8, 32], strides = [1, 1]} : vector<8x128xf32> to vector<8x32xf32>
    %36 = arith.negf %35 : vector<8x32xf32>
    %37 = math.exp %36 : vector<8x32xf32>
    %cst_18 = arith.constant 1.000000e+00 : f32
    %38 = vector.broadcast %cst_18 : f32 to vector<8x32xf32>
    %39 = arith.addf %38, %37 : vector<8x32xf32>
    %40 = arith.divf %38, %39 : vector<8x32xf32>
    %41 = vector.extract_strided_slice %34 {offsets = [0, 64], sizes = [8, 32], strides = [1, 1]} : vector<8x128xf32> to vector<8x32xf32>
    %42 = math.tanh %41 : vector<8x32xf32>
    %43 = vector.extract_strided_slice %34 {offsets = [0, 96], sizes = [8, 32], strides = [1, 1]} : vector<8x128xf32> to vector<8x32xf32>
    %44 = arith.negf %43 : vector<8x32xf32>
    %45 = math.exp %44 : vector<8x32xf32>
    %cst_19 = arith.constant 1.000000e+00 : f32
    %46 = vector.broadcast %cst_19 : f32 to vector<8x32xf32>
    %47 = arith.addf %46, %45 : vector<8x32xf32>
    %48 = arith.divf %46, %47 : vector<8x32xf32>
    %49 = arith.mulf %40, %42 : vector<8x32xf32>
    %50 = math.tanh %49 : vector<8x32xf32>
    %51 = arith.mulf %48, %50 : vector<8x32xf32>
    %c0_20 = arith.constant 0 : index
    %c0_21 = arith.constant 0 : index
    %52 = vector.load %arg8[%c0_20, %c0_21] : memref<32x512xf32, #tpu.memory_space<vmem>>, vector<32x512xf32>
    %cst_22 = arith.constant dense<0.000000e+00> : vector<8x512xf32>
    %53 = tpu.matmul %51, %52, %cst_22 {dimension_numbers = #tpu.dot_dimension_numbers<[1], [0], [0], [1], [0, 0, 1, 1], [], []>} : vector<8x32xf32>, vector<32x512xf32>, vector<8x512xf32> -> vector<8x512xf32>
    %c0_23 = arith.constant 0 : index
    %c0_24 = arith.constant 0 : index
    %54 = vector.load %arg9[%c0_23, %c0_24] : memref<1x512xf32, #tpu.memory_space<vmem>>, vector<1x512xf32>
    %55 = vector.broadcast %54 : vector<1x512xf32> to vector<8x512xf32>
    %56 = arith.addf %53, %55 : vector<8x512xf32>
    %c0_25 = arith.constant 0 : index
    %c0_26 = arith.constant 0 : index
    %57 = vector.load %arg10[%c0_25, %c0_26] : memref<8x512xf32, #tpu.memory_space<vmem>>, vector<8x512xf32>
    tpu.vector_store %arg10[%c0_25, %c0_26], %56 {strides = array<i32>} : memref<8x512xf32, #tpu.memory_space<vmem>>, vector<8x512xf32>,
    return
  }
  func.func @transform_0(%arg0: i32) -> (i32, i32) {
    %c0_i32 = arith.constant 0 : i32
    %c0_i32_0 = arith.constant 0 : i32
    %c0_i32_1 = arith.constant 0 : i32
    return %c0_i32, %c0_i32_0 : i32, i32
  }
  func.func @transform_1(%arg0: i32) -> (i32, i32) {
    %c0_i32 = arith.constant 0 : i32
    %c0_i32_0 = arith.constant 0 : i32
    %c0_i32_1 = arith.constant 0 : i32
    return %c0_i32, %c0_i32_0 : i32, i32
  }
  func.func @transform_2(%arg0: i32) -> (i32, i32) {
    %c0_i32 = arith.constant 0 : i32
    %c0_i32_0 = arith.constant 0 : i32
    %c0_i32_1 = arith.constant 0 : i32
    return %c0_i32, %c0_i32_0 : i32, i32
  }
  func.func @transform_3(%arg0: i32) -> (i32, i32) {
    %c0_i32 = arith.constant 0 : i32
    %c0_i32_0 = arith.constant 0 : i32
    %c0_i32_1 = arith.constant 0 : i32
    return %c0_i32, %c0_i32_0 : i32, i32
  }
  func.func @transform_4(%arg0: i32) -> (i32, i32) {
    %c0_i32 = arith.constant 0 : i32
    %c0_i32_0 = arith.constant 0 : i32
    %c0_i32_1 = arith.constant 0 : i32
    return %c0_i32, %c0_i32_0 : i32, i32
  }
  func.func @transform_5(%arg0: i32) -> (i32, i32) {
    %c0_i32 = arith.constant 0 : i32
    %c0_i32_0 = arith.constant 0 : i32
    %c0_i32_1 = arith.constant 0 : i32
    return %c0_i32, %c0_i32_0 : i32, i32
  }
  func.func @transform_6(%arg0: i32) -> (i32, i32) {
    %c0_i32 = arith.constant 0 : i32
    %c0_i32_0 = arith.constant 0 : i32
    %c0_i32_1 = arith.constant 0 : i32
    return %c0_i32, %c0_i32_0 : i32, i32
  }
  func.func @transform_7(%arg0: i32) -> (i32, i32) {
    %c0_i32 = arith.constant 0 : i32
    %c0_i32_0 = arith.constant 0 : i32
    %c0_i32_1 = arith.constant 0 : i32
    return %c0_i32, %c0_i32_0 : i32, i32
  }
  func.func @transform_8(%arg0: i32) -> (i32, i32) {
    %c0_i32 = arith.constant 0 : i32
    %c0_i32_0 = arith.constant 0 : i32
    %c0_i32_1 = arith.constant 0 : i32
    return %c0_i32, %c0_i32_0 : i32, i32
  }
  func.func @transform_9(%arg0: i32) -> (i32, i32) {
    %c0_i32 = arith.constant 0 : i32
    %c0_i32_0 = arith.constant 0 : i32
    %c0_i32_1 = arith.constant 0 : i32
    return %c0_i32, %c0_i32_0 : i32, i32
  }
}

</mosaic_0001>

<llo_original>
// kernel: conv_lstm1d_forward.1
$region0: #{conv_lstm1d_forward.1}
  #allocation0 [shape = 'u32[]', space=smem, size = 0x4, offset = 0x4, fixed_abs, tag = 'smem constant byte address 0x4 - core index']
  #allocation1 [shape = 'u32[144,128]{1,0:T(1,128)}', space=vmem, size = 0x12000, scoped, tag = 'internal scratch']
  #allocation2 [shape = 'f32[1,1]{1,0:T(1,128)S(6)}', space=smem, size = 0x200, scoped, tag = 'scoped memory for conv_lstm1d_forward.1']
  %s0 = inlined_call_operand.vmem [shape: f32[8,200], index: 0, kind: input, shape index: {}]
  %s1 = inlined_call_operand.vmem [shape: f32[200,16], index: 1, kind: input, shape index: {}]
  %s2 = inlined_call_operand.<no memory space> [shape: f32[1,1], index: 2, kind: input, shape index: {}]
  %s3 = inlined_call_operand.vmem [shape: f32[16,128], index: 3, kind: input, shape index: {}]
  %s4 = inlined_call_operand.vmem [shape: f32[1,128], index: 4, kind: input, shape index: {}]
  %s5 = inlined_call_operand.vmem [shape: f32[32,128], index: 5, kind: input, shape index: {}]
  %s6 = inlined_call_operand.vmem [shape: f32[1,128], index: 6, kind: input, shape index: {}]
  %s7 = inlined_call_operand.vmem [shape: f32[32,512], index: 7, kind: input, shape index: {}]
  %s8 = inlined_call_operand.vmem [shape: f32[1,512], index: 8, kind: input, shape index: {}]
  %s9 = inlined_call_operand.vmem [shape: f32[8,512], index: 9, kind: output, shape index: {}]
  %s10 = sld [smem:[#allocation0]]
  $region46: #{conv_lstm1d_forward.1} parent=0
    _
  %s12 = ssub.s32 1, %s10
  %s13 = scalar_select 0, %s12, %s10
  %14 = sst [smem:[#allocation2]] %s2
  // Predicated region
  $region2: #{conv_lstm1d_forward.1} parent=0 // pred_check
    _
  $region3: #{conv_lstm1d_forward.1} parent=0 // pred_check_branch
    %16 = sbr.rel (0) target = $region5
  $region4: #{conv_lstm1d_forward.1} parent=0 // pred_region
    _
  $region5: #{conv_lstm1d_forward.1} parent=0 // pred_fallthru
    _
  // Predicated region
  $region6: #{conv_lstm1d_forward.1} parent=0 // pred_check
    _
  $region7: #{conv_lstm1d_forward.1} parent=0 // pred_check_branch
    %18 = sbr.rel (0) target = $region9
  $region8: #{conv_lstm1d_forward.1} parent=0 // pred_region
    _
  $region9: #{conv_lstm1d_forward.1} parent=0 // pred_fallthru
    _
  // Predicated region
  $region10: #{conv_lstm1d_forward.1} parent=0 // pred_check
    _
  $region11: #{conv_lstm1d_forward.1} parent=0 // pred_check_branch
    %20 = sbr.rel (0) target = $region13
  $region12: #{conv_lstm1d_forward.1} parent=0 // pred_region
    _
  $region13: #{conv_lstm1d_forward.1} parent=0 // pred_fallthru
    _
  // Predicated region
  $region14: #{conv_lstm1d_forward.1} parent=0 // pred_check
    _
  $region15: #{conv_lstm1d_forward.1} parent=0 // pred_check_branch
    %22 = sbr.rel (0) target = $region17
  $region16: #{conv_lstm1d_forward.1} parent=0 // pred_region
    _
  $region17: #{conv_lstm1d_forward.1} parent=0 // pred_fallthru
    _
  // Predicated region
  $region18: #{conv_lstm1d_forward.1} parent=0 // pred_check
    _
  $region19: #{conv_lstm1d_forward.1} parent=0 // pred_check_branch
    %24 = sbr.rel (0) target = $region21
  $region20: #{conv_lstm1d_forward.1} parent=0 // pred_region
    _
  $region21: #{conv_lstm1d_forward.1} parent=0 // pred_fallthru
    _
  // Predicated region
  $region22: #{conv_lstm1d_forward.1} parent=0 // pred_check
    _
  $region23: #{conv_lstm1d_forward.1} parent=0 // pred_check_branch
    %26 = sbr.rel (0) target = $region25
  $region24: #{conv_lstm1d_forward.1} parent=0 // pred_region
    _
  $region25: #{conv_lstm1d_forward.1} parent=0 // pred_fallthru
    _
  // Predicated region
  $region26: #{conv_lstm1d_forward.1} parent=0 // pred_check
    _
  $region27: #{conv_lstm1d_forward.1} parent=0 // pred_check_branch
    %28 = sbr.rel (0) target = $region29
  $region28: #{conv_lstm1d_forward.1} parent=0 // pred_region
    _
  $region29: #{conv_lstm1d_forward.1} parent=0 // pred_fallthru
    _
  // Predicated region
  $region30: #{conv_lstm1d_forward.1} parent=0 // pred_check
    _
  $region31: #{conv_lstm1d_forward.1} parent=0 // pred_check_branch
    %30 = sbr.rel (0) target = $region33
  $region32: #{conv_lstm1d_forward.1} parent=0 // pred_region
    _
  $region33: #{conv_lstm1d_forward.1} parent=0 // pred_fallthru
    _
  // Predicated region
  $region34: #{conv_lstm1d_forward.1} parent=0 // pred_check
    _
  $region35: #{conv_lstm1d_forward.1} parent=0 // pred_check_branch
    %32 = sbr.rel (0) target = $region37
  $region36: #{conv_lstm1d_forward.1} parent=0 // pred_region
    _
  $region37: #{conv_lstm1d_forward.1} parent=0 // pred_fallthru
    _
  %v33 = vld [vmem:[%s0] sm:$0xff]
  %v34 = vld [vmem:[%s0 + $0x8] sm:$0xff]
  %v35 = vld [vmem:[%s1] sm:$0xff]
  %v36 = vld [vmem:[%s1 + $0x8] sm:$0xff]
  %v37 = vld [vmem:[%s1 + $0x10] sm:$0xff]
  %v38 = vld [vmem:[%s1 + $0x18] sm:$0xff]
  %v39 = vld [vmem:[%s1 + $0x20] sm:$0xff]
  %v40 = vld [vmem:[%s1 + $0x28] sm:$0xff]
  %v41 = vld [vmem:[%s1 + $0x30] sm:$0xff]
  %v42 = vld [vmem:[%s1 + $0x38] sm:$0xff]
  %v43 = vld [vmem:[%s1 + $0x40] sm:$0xff]
  %v44 = vld [vmem:[%s1 + $0x48] sm:$0xff]
  %v45 = vld [vmem:[%s1 + $0x50] sm:$0xff]
  %v46 = vld [vmem:[%s1 + $0x58] sm:$0xff]
  %v47 = vld [vmem:[%s1 + $0x60] sm:$0xff]
  %v48 = vld [vmem:[%s1 + $0x68] sm:$0xff]
  %v49 = vld [vmem:[%s1 + $0x70] sm:$0xff]
  %v50 = vld [vmem:[%s1 + $0x78] sm:$0xff]
  %v51 = vld [vmem:[%s1 + $0x80] sm:$0xff]
  %v52 = vld [vmem:[%s1 + $0x88] sm:$0xff]
  %v53 = vld [vmem:[%s1 + $0x90] sm:$0xff]
  %v54 = vld [vmem:[%s1 + $0x98] sm:$0xff]
  %v55 = vld [vmem:[%s1 + $0xa0] sm:$0xff]
  %v56 = vld [vmem:[%s1 + $0xa8] sm:$0xff]
  %v57 = vld [vmem:[%s1 + $0xb0] sm:$0xff]
  %v58 = vld [vmem:[%s1 + $0xb8] sm:$0xff]
  %v59 = vld [vmem:[%s1 + $0xc0] sm:$0xff]
  %s60 = sld [smem:[#allocation2]]
  %v61 = vstv %s60
  %vm62 = vcmask 588800
  %v64 = vsel %vm62, %v34, 0
  %66 = vmatprep.subr.mxu0 0.0
  %67 = vmatpush1.msra.mxu0 %v35
  %68 = vmatprep.subr.mxu0 0.0
  %69 = vmatpush1.msra.mxu0 %v36
  %70 = vmatprep.subr.mxu0 0.0
  %71 = vmatpush1.msra.mxu0 %v37
  %72 = vmatprep.subr.mxu0 0.0
  %73 = vmatpush1.msra.mxu0 %v38
  %74 = vmatprep.subr.mxu0 0.0
  %75 = vmatpush1.msra.mxu0 %v39
  %76 = vmatprep.subr.mxu0 0.0
  %77 = vmatpush1.msra.mxu0 %v40
  %78 = vmatprep.subr.mxu0 0.0
  %79 = vmatpush1.msra.mxu0 %v41
  %80 = vmatprep.subr.mxu0 0.0
  %81 = vmatpush1.msra.mxu0 %v42
  %82 = vmatprep.subr.mxu0 0.0
  %83 = vmatpush1.msra.mxu0 %v43
  %84 = vmatprep.subr.mxu0 0.0
  %85 = vmatpush1.msra.mxu0 %v44
  %86 = vmatprep.subr.mxu0 0.0
  %87 = vmatpush1.msra.mxu0 %v45
  %88 = vmatprep.subr.mxu0 0.0
  %89 = vmatpush1.msra.mxu0 %v46
  %90 = vmatprep.subr.mxu0 0.0
  %91 = vmatpush1.msra.mxu0 %v47
  %92 = vmatprep.subr.mxu0 0.0
  %93 = vmatpush1.msra.mxu0 %v48
  %94 = vmatprep.subr.mxu0 0.0
  %95 = vmatpush1.msra.mxu0 %v49
  %96 = vmatprep.subr.mxu0 0.0
  %97 = vmatpush1.msra.mxu0 %v50
  %98 = vmatprep.subr.mxu0 0.0
  %99 = vmatpush1.msra.mxu0 %v51
  %100 = vmatprep.subr.mxu0 0.0
  %101 = vmatpush1.msra.mxu0 %v52
  %102 = vmatprep.subr.mxu0 0.0
  %103 = vmatpush1.msra.mxu0 %v53
  %104 = vmatprep.subr.mxu0 0.0
  %105 = vmatpush1.msra.mxu0 %v54
  %106 = vmatprep.subr.mxu0 0.0
  %107 = vmatpush1.msra.mxu0 %v55
  %108 = vmatprep.subr.mxu0 0.0
  %109 = vmatpush1.msra.mxu0 %v56
  %110 = vmatprep.subr.mxu0 0.0
  %111 = vmatpush1.msra.mxu0 %v57
  %112 = vmatprep.subr.mxu0 0.0
  %113 = vmatpush1.msra.mxu0 %v58
  %114 = vmatprep.subr.mxu0 0.0
  %115 = vmatpush1.msra.mxu0 %v59
  %116 = vmatprep.subr.mxu0 0.0
  %117 = vmatpush1.msra.mxu0 0.0
  %118 = vmatprep.subr.mxu0 0.0
  %119 = vmatpush1.msra.mxu0 0.0
  %120 = vmatprep.subr.mxu0 0.0
  %121 = vmatpush1.msra.mxu0 0.0
  %122 = vmatprep.subr.mxu0 0.0
  %123 = vmatpush1.msra.mxu0 0.0
  %124 = vmatprep.subr.mxu0 0.0
  %125 = vmatpush1.msra.mxu0 0.0
  %126 = vmatprep.subr.mxu0 0.0
  %127 = vmatpush1.msra.mxu0 0.0
  %128 = vmatprep.subr.mxu0 0.0
  %129 = vmatpush1.msra.mxu0 0.0
  %130 = vmatprep.mubr.f32.mxu0 %v64
  %131 = vmatmul.mubr.f32.gmra.mrb[0].mxu0 %v33
  %v132 = vpop.f32.mrb[0].mxu0
  %v133 = vadd.f32 %v61, %v132
  %v134 = vpop.f32.mrb[0].mxu0
  %135 = vdwg.mxu0
  %v136 = vmax.f32 %v133, 0.0
  %v137 = vld [vmem:[%s3] sm:$0xff]
  %v138 = vld [vmem:[%s3 + $0x8] sm:$0xff]
  %v139 = vld [vmem:[%s4] sm:$0x1]
  %v141 = vlaneseq
  %v142 = vshrl.u32 %v141, 7
  %v143 = vsub.s32 0, %v142
  %v144 = vrot.slane %v139, %v143
  %vm146 = vcmask 130048
  %v148 = vsel %vm146, %v136, 0
  %150 = vmatprep.subr.mxu0 0.0
  %151 = vmatpush1.msra.mxu0 %v137
  %152 = vmatprep.subr.mxu0 0.0
  %153 = vmatpush1.msra.mxu0 %v138
  %154 = vmatprep.subr.mxu0 0.0
  %155 = vmatpush1.msra.mxu0 0.0
  %156 = vmatprep.subr.mxu0 0.0
  %157 = vmatpush1.msra.mxu0 0.0
  %158 = vmatprep.subr.mxu0 0.0
  %159 = vmatpush1.msra.mxu0 0.0
  %160 = vmatprep.subr.mxu0 0.0
  %161 = vmatpush1.msra.mxu0 0.0
  %162 = vmatprep.subr.mxu0 0.0
  %163 = vmatpush1.msra.mxu0 0.0
  %164 = vmatprep.subr.mxu0 0.0
  %165 = vmatpush1.msra.mxu0 0.0
  %166 = vmatprep.subr.mxu0 0.0
  %167 = vmatpush1.msra.mxu0 0.0
  %168 = vmatprep.subr.mxu0 0.0
  %169 = vmatpush1.msra.mxu0 0.0
  %170 = vmatprep.subr.mxu0 0.0
  %171 = vmatpush1.msra.mxu0 0.0
  %172 = vmatprep.subr.mxu0 0.0
  %173 = vmatpush1.msra.mxu0 0.0
  %174 = vmatprep.subr.mxu0 0.0
  %175 = vmatpush1.msra.mxu0 0.0
  %176 = vmatprep.subr.mxu0 0.0
  %177 = vmatpush1.msra.mxu0 0.0
  %178 = vmatprep.subr.mxu0 0.0
  %179 = vmatpush1.msra.mxu0 0.0
  %180 = vmatprep.subr.mxu0 0.0
  %181 = vmatpush1.msra.mxu0 0.0
  %182 = vmatprep.subr.mxu0 0.0
  %183 = vmatpush1.msra.mxu0 0.0
  %184 = vmatprep.subr.mxu0 0.0
  %185 = vmatpush1.msra.mxu0 0.0
  %186 = vmatprep.subr.mxu0 0.0
  %187 = vmatpush1.msra.mxu0 0.0
  %188 = vmatprep.subr.mxu0 0.0
  %189 = vmatpush1.msra.mxu0 0.0
  %190 = vmatprep.subr.mxu0 0.0
  %191 = vmatpush1.msra.mxu0 0.0
  %192 = vmatprep.subr.mxu0 0.0
  %193 = vmatpush1.msra.mxu0 0.0
  %194 = vmatprep.subr.mxu0 0.0
  %195 = vmatpush1.msra.mxu0 0.0
  %196 = vmatprep.subr.mxu0 0.0
  %197 = vmatpush1.msra.mxu0 0.0
  %198 = vmatprep.subr.mxu0 0.0
  %199 = vmatpush1.msra.mxu0 0.0
  %200 = vmatprep.subr.mxu0 0.0
  %201 = vmatpush1.msra.mxu0 0.0
  %202 = vmatprep.subr.mxu0 0.0
  %203 = vmatpush1.msra.mxu0 0.0
  %204 = vmatprep.subr.mxu0 0.0
  %205 = vmatpush1.msra.mxu0 0.0
  %206 = vmatprep.subr.mxu0 0.0
  %207 = vmatpush1.msra.mxu0 0.0
  %208 = vmatprep.subr.mxu0 0.0
  %209 = vmatpush1.msra.mxu0 0.0
  %210 = vmatprep.subr.mxu0 0.0
  %211 = vmatpush1.msra.mxu0 0.0
  %212 = vmatprep.subr.mxu0 0.0
  %213 = vmatpush1.msra.mxu0 0.0
  %214 = vmatprep.mubr.f32.mxu0 0.0
  %215 = vmatmul.mubr.f32.gmra.mrb[0].mxu0 %v148
  %v216 = vpop.f32.mrb[0].mxu0
  %v217 = vadd.f32 %v144, %v216
  %v218 = vpop.f32.mrb[0].mxu0
  %219 = vdwg.mxu0
  %v220 = vxor.u32 %v217, 2147483648
  %v221 = vmul.f32 %v220, 1.442695
  %v222 = vpow.pop %v221
  %v223 = vadd.f32 %v222, 1.0
  %v224 = vrcp.pop %v223
  %v225 = vmul.f32 1.0, %v224
  %v226 = vtanh.pop %v217
  %228 = vrot.lane.b32.xlu0 %v226, 64
  %v229 = vpop.permute.xlu0 %228
  %v231 = vmul.f32 %v225, %v229
  %v232 = vtanh.pop %v231
  %234 = vrot.lane.b32.xlu0 %v232, 96
  %v235 = vpop.permute.xlu0 %234
  %v237 = vmul.f32 %v225, %v235
  %v238 = vld [vmem:[%s5] sm:$0xff]
  %v239 = vld [vmem:[%s5 + $0x8] sm:$0xff]
  %v240 = vld [vmem:[%s5 + $0x10] sm:$0xff]
  %v241 = vld [vmem:[%s5 + $0x18] sm:$0xff]
  %v242 = vld [vmem:[%s6] sm:$0x1]
  %v244 = vlaneseq
  %v245 = vshrl.u32 %v244, 7
  %v246 = vsub.s32 0, %v245
  %v247 = vrot.slane %v242, %v246
  %250 = vrot.lane.b32.xlu0 %v237, 32
  %v251 = vpop.permute.xlu0 %250
  %vm252 = vcmask 261120
  %v253 = vsel %vm252, %v251, 0
  %255 = vmatprep.subr.mxu0 0.0
  %256 = vmatpush1.msra.mxu0 %v238
  %257 = vmatprep.subr.mxu0 0.0
  %258 = vmatpush1.msra.mxu0 %v239
  %259 = vmatprep.subr.mxu0 0.0
  %260 = vmatpush1.msra.mxu0 %v240
  %261 = vmatprep.subr.mxu0 0.0
  %262 = vmatpush1.msra.mxu0 %v241
  %263 = vmatprep.subr.mxu0 0.0
  %264 = vmatpush1.msra.mxu0 0.0
  %265 = vmatprep.subr.mxu0 0.0
  %266 = vmatpush1.msra.mxu0 0.0
  %267 = vmatprep.subr.mxu0 0.0
  %268 = vmatpush1.msra.mxu0 0.0
  %269 = vmatprep.subr.mxu0 0.0
  %270 = vmatpush1.msra.mxu0 0.0
  %271 = vmatprep.subr.mxu0 0.0
  %272 = vmatpush1.msra.mxu0 0.0
  %273 = vmatprep.subr.mxu0 0.0
  %274 = vmatpush1.msra.mxu0 0.0
  %275 = vmatprep.subr.mxu0 0.0
  %276 = vmatpush1.msra.mxu0 0.0
  %277 = vmatprep.subr.mxu0 0.0
  %278 = vmatpush1.msra.mxu0 0.0
  %279 = vmatprep.subr.mxu0 0.0
  %280 = vmatpush1.msra.mxu0 0.0
  %281 = vmatprep.subr.mxu0 0.0
  %282 = vmatpush1.msra.mxu0 0.0
  %283 = vmatprep.subr.mxu0 0.0
  %284 = vmatpush1.msra.mxu0 0.0
  %285 = vmatprep.subr.mxu0 0.0
  %286 = vmatpush1.msra.mxu0 0.0
  %287 = vmatprep.subr.mxu0 0.0
  %288 = vmatpush1.msra.mxu0 0.0
  %289 = vmatprep.subr.mxu0 0.0
  %290 = vmatpush1.msra.mxu0 0.0
  %291 = vmatprep.subr.mxu0 0.0
  %292 = vmatpush1.msra.mxu0 0.0
  %293 = vmatprep.subr.mxu0 0.0
  %294 = vmatpush1.msra.mxu0 0.0
  %295 = vmatprep.subr.mxu0 0.0
  %296 = vmatpush1.msra.mxu0 0.0
  %297 = vmatprep.subr.mxu0 0.0
  %298 = vmatpush1.msra.mxu0 0.0
  %299 = vmatprep.subr.mxu0 0.0
  %300 = vmatpush1.msra.mxu0 0.0
  %301 = vmatprep.subr.mxu0 0.0
  %302 = vmatpush1.msra.mxu0 0.0
  %303 = vmatprep.subr.mxu0 0.0
  %304 = vmatpush1.msra.mxu0 0.0
  %305 = vmatprep.subr.mxu0 0.0
  %306 = vmatpush1.msra.mxu0 0.0
  %307 = vmatprep.subr.mxu0 0.0
  %308 = vmatpush1.msra.mxu0 0.0
  %309 = vmatprep.subr.mxu0 0.0
  %310 = vmatpush1.msra.mxu0 0.0
  %311 = vmatprep.subr.mxu0 0.0
  %312 = vmatpush1.msra.mxu0 0.0
  %313 = vmatprep.subr.mxu0 0.0
  %314 = vmatpush1.msra.mxu0 0.0
  %315 = vmatprep.subr.mxu0 0.0
  %316 = vmatpush1.msra.mxu0 0.0
  %317 = vmatprep.subr.mxu0 0.0
  %318 = vmatpush1.msra.mxu0 0.0
  %319 = vmatprep.mubr.f32.mxu0 0.0
  %320 = vmatmul.mubr.f32.gmra.mrb[0].mxu0 %v253
  %v321 = vpop.f32.mrb[0].mxu0
  %v322 = vadd.f32 %v247, %v321
  %v323 = vpop.f32.mrb[0].mxu0
  %324 = vdwg.mxu0
  %v325 = vxor.u32 %v322, 2147483648
  %v326 = vmul.f32 %v325, 1.442695
  %v327 = vpow.pop %v326
  %v328 = vadd.f32 %v327, 1.0
  %v329 = vrcp.pop %v328
  %v330 = vmul.f32 1.0, %v329
  %v331 = vtanh.pop %v322
  %333 = vrot.lane.b32.xlu0 %v331, 64
  %v334 = vpop.permute.xlu0 %333
  %v336 = vmul.f32 %v330, %v334
  %v337 = vtanh.pop %v336
  %339 = vrot.lane.b32.xlu0 %v337, 96
  %v340 = vpop.permute.xlu0 %339
  %v342 = vmul.f32 %v330, %v340
  %v343 = vld [vmem:[%s7] sm:$0xff]
  %v344 = vld [vmem:[%s7 + $0x8] sm:$0xff]
  %v345 = vld [vmem:[%s7 + $0x10] sm:$0xff]
  %v346 = vld [vmem:[%s7 + $0x18] sm:$0xff]
  %v347 = vld [vmem:[%s7 + $0x20] sm:$0xff]
  %v348 = vld [vmem:[%s7 + $0x28] sm:$0xff]
  %v349 = vld [vmem:[%s7 + $0x30] sm:$0xff]
  %v350 = vld [vmem:[%s7 + $0x38] sm:$0xff]
  %v351 = vld [vmem:[%s7 + $0x40] sm:$0xff]
  %v352 = vld [vmem:[%s7 + $0x48] sm:$0xff]
  %v353 = vld [vmem:[%s7 + $0x50] sm:$0xff]
  %v354 = vld [vmem:[%s7 + $0x58] sm:$0xff]
  %v355 = vld [vmem:[%s7 + $0x60] sm:$0xff]
  %v356 = vld [vmem:[%s7 + $0x68] sm:$0xff]
  %v357 = vld [vmem:[%s7 + $0x70] sm:$0xff]
  %v358 = vld [vmem:[%s7 + $0x78] sm:$0xff]
  %v359 = vld [vmem:[%s8] sm:$0xf]
  %v361 = vlaneseq
  %v362 = vshrl.u32 %v361, 7
  %v363 = vsub.s32 0, %v362
  %v364 = vrot.slane %v359, %v363
  %v365 = vlaneseq
  %v366 = vshrl.u32 %v365, 7
  %v367 = vsub.s32 1, %v366
  %v368 = vrot.slane %v359, %v367
  %v369 = vlaneseq
  %v370 = vshrl.u32 %v369, 7
  %v371 = vsub.s32 2, %v370
  %v372 = vrot.slane %v359, %v371
  %v373 = vlaneseq
  %v374 = vshrl.u32 %v373, 7
  %v375 = vsub.s32 3, %v374
  %v376 = vrot.slane %v359, %v375
  %382 = vrot.lane.b32.xlu0 %v342, 32
  %v383 = vpop.permute.xlu0 %382
  %v384 = vsel %vm252, %v383, 0
  %386 = vmatprep.subr.mxu0 %v344
  %387 = vmatpush1.msra.mxu0 %v343
  %388 = vmatprep.subr.mxu0 %v348
  %389 = vmatpush1.msra.mxu0 %v347
  %390 = vmatprep.subr.mxu0 %v352
  %391 = vmatpush1.msra.mxu0 %v351
  %392 = vmatprep.subr.mxu0 %v356
  %393 = vmatpush1.msra.mxu0 %v355
  %394 = vmatprep.subr.mxu0 0.0
  %395 = vmatpush1.msra.mxu0 0.0
  %396 = vmatprep.subr.mxu0 0.0
  %397 = vmatpush1.msra.mxu0 0.0
  %398 = vmatprep.subr.mxu0 0.0
  %399 = vmatpush1.msra.mxu0 0.0
  %400 = vmatprep.subr.mxu0 0.0
  %401 = vmatpush1.msra.mxu0 0.0
  %402 = vmatprep.subr.mxu0 0.0
  %403 = vmatpush1.msra.mxu0 0.0
  %404 = vmatprep.subr.mxu0 0.0
  %405 = vmatpush1.msra.mxu0 0.0
  %406 = vmatprep.subr.mxu0 0.0
  %407 = vmatpush1.msra.mxu0 0.0
  %408 = vmatprep.subr.mxu0 0.0
  %409 = vmatpush1.msra.mxu0 0.0
  %410 = vmatprep.subr.mxu0 0.0
  %411 = vmatpush1.msra.mxu0 0.0
  %412 = vmatprep.subr.mxu0 0.0
  %413 = vmatpush1.msra.mxu0 0.0
  %414 = vmatprep.subr.mxu0 0.0
  %415 = vmatpush1.msra.mxu0 0.0
  %416 = vmatprep.subr.mxu0 0.0
  %417 = vmatpush1.msra.mxu0 0.0
  %418 = vmatprep.subr.mxu0 0.0
  %419 = vmatpush1.msra.mxu0 0.0
  %420 = vmatprep.subr.mxu0 0.0
  %421 = vmatpush1.msra.mxu0 0.0
  %422 = vmatprep.subr.mxu0 0.0
  %423 = vmatpush1.msra.mxu0 0.0
  %424 = vmatprep.subr.mxu0 0.0
  %425 = vmatpush1.msra.mxu0 0.0
  %426 = vmatprep.subr.mxu0 0.0
  %427 = vmatpush1.msra.mxu0 0.0
  %428 = vmatprep.subr.mxu0 0.0
  %429 = vmatpush1.msra.mxu0 0.0
  %430 = vmatprep.subr.mxu0 0.0
  %431 = vmatpush1.msra.mxu0 0.0
  %432 = vmatprep.subr.mxu0 0.0
  %433 = vmatpush1.msra.mxu0 0.0
  %434 = vmatprep.subr.mxu0 0.0
  %435 = vmatpush1.msra.mxu0 0.0
  %436 = vmatprep.subr.mxu0 0.0
  %437 = vmatpush1.msra.mxu0 0.0
  %438 = vmatprep.subr.mxu0 0.0
  %439 = vmatpush1.msra.mxu0 0.0
  %440 = vmatprep.subr.mxu0 0.0
  %441 = vmatpush1.msra.mxu0 0.0
  %442 = vmatprep.subr.mxu0 0.0
  %443 = vmatpush1.msra.mxu0 0.0
  %444 = vmatprep.subr.mxu0 0.0
  %445 = vmatpush1.msra.mxu0 0.0
  %446 = vmatprep.subr.mxu0 0.0
  %447 = vmatpush1.msra.mxu0 0.0
  %448 = vmatprep.subr.mxu0 0.0
  %449 = vmatpush1.msra.mxu0 0.0
  %450 = vmatprep.mubr.f32.mxu0 0.0
  %451 = vmatmul.mubr.f32.gmra.mrb[0].mxu0 %v384
  %v452 = vpop.f32.mrb[0].mxu0
  %v453 = vadd.f32 %v364, %v452
  %v454 = vpop.f32.mrb[0].mxu0
  %v455 = vadd.f32 %v368, %v454
  %456 = vdwg.mxu0
  %457 = vmatprep.subr.mxu0 %v346
  %458 = vmatpush1.msra.mxu0 %v345
  %459 = vmatprep.subr.mxu0 %v350
  %460 = vmatpush1.msra.mxu0 %v349
  %461 = vmatprep.subr.mxu0 %v354
  %462 = vmatpush1.msra.mxu0 %v353
  %463 = vmatprep.subr.mxu0 %v358
  %464 = vmatpush1.msra.mxu0 %v357
  %465 = vmatprep.subr.mxu0 0.0
  %466 = vmatpush1.msra.mxu0 0.0
  %467 = vmatprep.subr.mxu0 0.0
  %468 = vmatpush1.msra.mxu0 0.0
  %469 = vmatprep.subr.mxu0 0.0
  %470 = vmatpush1.msra.mxu0 0.0
  %471 = vmatprep.subr.mxu0 0.0
  %472 = vmatpush1.msra.mxu0 0.0
  %473 = vmatprep.subr.mxu0 0.0
  %474 = vmatpush1.msra.mxu0 0.0
  %475 = vmatprep.subr.mxu0 0.0
  %476 = vmatpush1.msra.mxu0 0.0
  %477 = vmatprep.subr.mxu0 0.0
  %478 = vmatpush1.msra.mxu0 0.0
  %479 = vmatprep.subr.mxu0 0.0
  %480 = vmatpush1.msra.mxu0 0.0
  %481 = vmatprep.subr.mxu0 0.0
  %482 = vmatpush1.msra.mxu0 0.0
  %483 = vmatprep.subr.mxu0 0.0
  %484 = vmatpush1.msra.mxu0 0.0
  %485 = vmatprep.subr.mxu0 0.0
  %486 = vmatpush1.msra.mxu0 0.0
  %487 = vmatprep.subr.mxu0 0.0
  %488 = vmatpush1.msra.mxu0 0.0
  %489 = vmatprep.subr.mxu0 0.0
  %490 = vmatpush1.msra.mxu0 0.0
  %491 = vmatprep.subr.mxu0 0.0
  %492 = vmatpush1.msra.mxu0 0.0
  %493 = vmatprep.subr.mxu0 0.0
  %494 = vmatpush1.msra.mxu0 0.0
  %495 = vmatprep.subr.mxu0 0.0
  %496 = vmatpush1.msra.mxu0 0.0
  %497 = vmatprep.subr.mxu0 0.0
  %498 = vmatpush1.msra.mxu0 0.0
  %499 = vmatprep.subr.mxu0 0.0
  %500 = vmatpush1.msra.mxu0 0.0
  %501 = vmatprep.subr.mxu0 0.0
  %502 = vmatpush1.msra.mxu0 0.0
  %503 = vmatprep.subr.mxu0 0.0
  %504 = vmatpush1.msra.mxu0 0.0
  %505 = vmatprep.subr.mxu0 0.0
  %506 = vmatpush1.msra.mxu0 0.0
  %507 = vmatprep.subr.mxu0 0.0
  %508 = vmatpush1.msra.mxu0 0.0
  %509 = vmatprep.subr.mxu0 0.0
  %510 = vmatpush1.msra.mxu0 0.0
  %511 = vmatprep.subr.mxu0 0.0
  %512 = vmatpush1.msra.mxu0 0.0
  %513 = vmatprep.subr.mxu0 0.0
  %514 = vmatpush1.msra.mxu0 0.0
  %515 = vmatprep.subr.mxu0 0.0
  %516 = vmatpush1.msra.mxu0 0.0
  %517 = vmatprep.subr.mxu0 0.0
  %518 = vmatpush1.msra.mxu0 0.0
  %519 = vmatprep.subr.mxu0 0.0
  %520 = vmatpush1.msra.mxu0 0.0
  %521 = vmatprep.mubr.f32.mxu0 0.0
  %522 = vmatmul.mubr.f32.gmra.mrb[0].mxu0 %v384
  %v523 = vpop.f32.mrb[0].mxu0
  %v524 = vadd.f32 %v372, %v523
  %v525 = vpop.f32.mrb[0].mxu0
  %v526 = vadd.f32 %v376, %v525
  %527 = vdwg.mxu0
  %528 = vst [vmem:[%s9] sm:$0xff] %v453
  %529 = vst [vmem:[%s9 + $0x8] sm:$0xff] %v455
  %530 = vst [vmem:[%s9 + $0x10] sm:$0xff] %v524
  %531 = vst [vmem:[%s9 + $0x18] sm:$0xff] %v526
  // Predicated region
  $region38: #{conv_lstm1d_forward.1} parent=0 // pred_check
    _
  $region39: #{conv_lstm1d_forward.1} parent=0 // pred_check_branch
    %533 = sbr.rel (0) target = $region41
  $region40: #{conv_lstm1d_forward.1} parent=0 // pred_region
    _
  $region41: #{conv_lstm1d_forward.1} parent=0 // pred_fallthru
    _
  // Predicated region
  $region42: #{conv_lstm1d_forward.1} parent=0 // pred_check
    _
  $region43: #{conv_lstm1d_forward.1} parent=0 // pred_check_branch
    %535 = sbr.rel (0) target = $region45
  $region44: #{conv_lstm1d_forward.1} parent=0 // pred_region
    _
  $region45: #{conv_lstm1d_forward.1} parent=0 // pred_fallthru
    _

</llo_original>
